<compile_context>
chip_gen: v7x
topology: tpu7x:2x2x1
jax: 0.10.0
libtpu: 0.0.40
codegen_flags: <defaults>
</compile_context>

<pallas_src>
from functools import partial

import jax
import jax.numpy as jnp
from jax.experimental import pallas as pl
from jax.experimental.pallas import tpu as pltpu


def fused_elmo_head_kernel(x_ref, w_ref, b_ref, o_ref):
    """Single fused (fc -> dropout(eval) -> cls) matmul on a packed row tile.

    x_ref : (TR, PACK*D)    bf16, 16 logical rows packed per physical row
    w_ref : (PACK*D, 128)   bf16, block-diagonal kron(I_PACK, Wc)
    b_ref : (1, 128)        f32, tiled fused bias
    o_ref : (TR, 128)       f32, 16 logical rows x 8 labels per physical row
    """
    y = jnp.dot(x_ref[...], w_ref[...], preferred_element_type=jnp.float32)
    o_ref[...] = (y + b_ref[...]).astype(o_ref.dtype)


def _round_up(a, m):
    return (a + m - 1) // m * m


@partial(jax.jit, static_argnames=("row_tile_phys",))
def elmo_forward(token_ids, params, *, row_tile_phys=512):
    """Full ELMO.forward: embedding gather (glue) + fused Pallas head kernel."""
    emb_table = params["elmo_table"]                    # frozen "ELMo" stand-in
    B, S = token_ids.shape
    D = emb_table.shape[1]
    num_labels = params["cls_b"].shape[0]
    assert 128 % num_labels == 0, "packing assumes num_labels divides 128"
    PACK = 128 // num_labels                            # logical rows / phys row

    # --- algebraic fusion of the two linears (dropout is identity in eval) ---
    Wc = params["fc_w"].T @ params["cls_w"].T                    # (D, LBL)
    bc = params["fc_b"] @ params["cls_w"].T + params["cls_b"]    # (LBL,)
    # block-diagonal packed weight / tiled bias -> lane-dense 128-wide output
    w_block = jnp.kron(jnp.eye(PACK, dtype=Wc.dtype), Wc).astype(jnp.bfloat16)
    b_block = jnp.tile(bc, PACK)[None, :].astype(jnp.float32)    # (1, 128)

    # --- glue: embedding gather, pad, pack rows ---
    R = B * S
    R_phys = pl.cdiv(R, PACK)
    tile_phys = min(row_tile_phys, _round_up(R_phys, 16))        # multiple of 16
    R_phys_pad = _round_up(R_phys, tile_phys)
    R_pad = R_phys_pad * PACK

    x_flat = emb_table[token_ids.reshape(-1)]                    # (R, D) f32
    x_flat = jnp.pad(x_flat, ((0, R_pad - R), (0, 0)))
    x_packed = x_flat.reshape(R_phys_pad, PACK * D).astype(jnp.bfloat16)

    grid = (R_phys_pad // tile_phys,)

    logits_packed = pl.pallas_call(
        fused_elmo_head_kernel,
        out_shape=jax.ShapeDtypeStruct((R_phys_pad, PACK * num_labels),
                                       jnp.float32),
        grid_spec=pltpu.PrefetchScalarGridSpec(
            num_scalar_prefetch=0,
            grid=grid,
            in_specs=[
                pl.BlockSpec((tile_phys, PACK * D), lambda i: (i, 0)),   # x rows
                pl.BlockSpec((PACK * D, PACK * num_labels),
                             lambda i: (0, 0)),                          # weight
                pl.BlockSpec((1, PACK * num_labels), lambda i: (0, 0)),  # bias
            ],
            out_specs=pl.BlockSpec((tile_phys, PACK * num_labels),
                                   lambda i: (i, 0)),
        ),
        compiler_params=pltpu.CompilerParams(
            dimension_semantics=("parallel",)),
    )(x_packed, w_block, b_block)

    logits = logits_packed.reshape(R_pad, num_labels)[:R]
    return logits.reshape(B, S, num_labels)


def init_params(key, *, vocab, input_dim, out_size, num_labels):
    """Deterministic parameter init mirroring the module's __init__."""
    k_emb, k_fcw, k_fcb, k_clw, k_clb = jax.random.split(key, 5)
    return {
        # frozen ELMo stand-in (requires_grad=False in the original)
        "elmo_table": 0.1 * jax.random.normal(k_emb, (vocab, input_dim), jnp.float32),
        # Classifier.fc: nn.Linear(input_dim, out_size), U(-0.5,0.5)/U(-0.1,0.1)
        "fc_w": jax.random.uniform(k_fcw, (out_size, input_dim), jnp.float32, -0.5, 0.5),
        "fc_b": jax.random.uniform(k_fcb, (out_size,), jnp.float32, -0.1, 0.1),
        # ELMO.cls: nn.Linear(out_size, num_labels), U(-0.1,0.1)
        "cls_w": jax.random.uniform(k_clw, (num_labels, out_size), jnp.float32, -0.1, 0.1),
        "cls_b": jax.random.uniform(k_clb, (num_labels,), jnp.float32, -0.1, 0.1),
    }


def reference_forward(token_ids, params):
    """Plain-JAX f32 reference of the same forward pass (unfused)."""
    B, S = token_ids.shape
    embs = params["elmo_table"][token_ids.reshape(-1)]
    h = embs @ params["fc_w"].T + params["fc_b"]
    y = h @ params["cls_w"].T + params["cls_b"]
    return y.reshape(B, S, params["cls_b"].shape[0])


if __name__ == "__main__":
    # small shapes consistent with the module
    B, S = 2, 8
    VOCAB, INPUT_DIM, OUT_SIZE, NUM_LABELS = 100, 32, 32, 8

    key = jax.random.PRNGKey(0)
    k_params, k_tokens = jax.random.split(key)

    params = init_params(
        k_params, vocab=VOCAB, input_dim=INPUT_DIM,
        out_size=OUT_SIZE, num_labels=NUM_LABELS)

    token_ids = jax.random.randint(k_tokens, (B, S), 0, VOCAB, dtype=jnp.int32)

    logits = elmo_forward(token_ids, params)
    logits = jax.block_until_ready(logits)

    ref = reference_forward(token_ids, params)
    assert logits.shape == (B, S, NUM_LABELS)
    # tolerance loosened: fused-weight rounding order + bf16 input/weight cast
    assert jnp.allclose(logits, ref, atol=1e-2, rtol=1e-2), "mismatch vs reference"

    print("KERNEL_OK")
</pallas_src>

<mosaic_0001>
module attributes {stable_mosaic.version = 11 : i64} {
  func.func @fused_elmo_head_kernel(%arg0: i32, %arg1: memref<16x512xbf16, #tpu.memory_space<vmem>>, %arg2: memref<512x128xbf16, #tpu.memory_space<vmem>>, %arg3: memref<1x128xf32, #tpu.memory_space<vmem>>, %arg4: memref<16x128xf32, #tpu.memory_space<vmem>>) attributes {dimension_semantics = [#tpu.dimension_semantics<parallel>], iteration_bounds = array<i64: 1>, scalar_prefetch = 0 : i64, scratch_operands = 0 : i64, tpu.core_type = #tpu.core_type<tc>, window_params = [{transform_indices = @transform_0, window_bounds = array<i64: 16, 512>}, {pipeline_mode = #tpu.pipeline_mode<synchronous>, transform_indices = @transform_1, window_bounds = array<i64: 512, 128>}, {pipeline_mode = #tpu.pipeline_mode<synchronous>, transform_indices = @transform_2, window_bounds = array<i64: 1, 128>}, {transform_indices = @transform_3, window_bounds = array<i64: 16, 128>}]} {
    %c0 = arith.constant 0 : index
    %c0_0 = arith.constant 0 : index
    %0 = vector.load %arg1[%c0, %c0_0] : memref<16x512xbf16, #tpu.memory_space<vmem>>, vector<16x512xbf16>
    %c0_1 = arith.constant 0 : index
    %c0_2 = arith.constant 0 : index
    %1 = vector.load %arg2[%c0_1, %c0_2] : memref<512x128xbf16, #tpu.memory_space<vmem>>, vector<512x128xbf16>
    %cst = arith.constant dense<0.000000e+00> : vector<16x128xf32>
    %2 = tpu.matmul %0, %1, %cst {dimension_numbers = #tpu.dot_dimension_numbers<[1], [0], [0], [1], [0, 0, 1, 1], [], []>} : vector<16x512xbf16>, vector<512x128xbf16>, vector<16x128xf32> -> vector<16x128xf32>
    %c0_3 = arith.constant 0 : index
    %c0_4 = arith.constant 0 : index
    %3 = vector.load %arg3[%c0_3, %c0_4] : memref<1x128xf32, #tpu.memory_space<vmem>>, vector<1x128xf32>
    %4 = vector.broadcast %3 : vector<1x128xf32> to vector<16x128xf32>
    %5 = arith.addf %2, %4 : vector<16x128xf32>
    %c0_5 = arith.constant 0 : index
    %c0_6 = arith.constant 0 : index
    %6 = vector.load %arg4[%c0_5, %c0_6] : memref<16x128xf32, #tpu.memory_space<vmem>>, vector<16x128xf32>
    tpu.vector_store %arg4[%c0_5, %c0_6], %5 {strides = array<i32>} : memref<16x128xf32, #tpu.memory_space<vmem>>, vector<16x128xf32>,
    return
  }
  func.func @transform_0(%arg0: i32) -> (i32, i32) {
    %c0_i32 = arith.constant 0 : i32
    %c0_i32_0 = arith.constant 0 : i32
    return %arg0, %c0_i32 : i32, i32
  }
  func.func @transform_1(%arg0: i32) -> (i32, i32) {
    %c0_i32 = arith.constant 0 : i32
    %c0_i32_0 = arith.constant 0 : i32
    %c0_i32_1 = arith.constant 0 : i32
    return %c0_i32, %c0_i32_0 : i32, i32
  }
  func.func @transform_2(%arg0: i32) -> (i32, i32) {
    %c0_i32 = arith.constant 0 : i32
    %c0_i32_0 = arith.constant 0 : i32
    %c0_i32_1 = arith.constant 0 : i32
    return %c0_i32, %c0_i32_0 : i32, i32
  }
  func.func @transform_3(%arg0: i32) -> (i32, i32) {
    %c0_i32 = arith.constant 0 : i32
    %c0_i32_0 = arith.constant 0 : i32
    return %arg0, %c0_i32 : i32, i32
  }
}

</mosaic_0001>

<llo_original>
// kernel: tile.8
$region0: #{tile.8}
  #allocation0 [shape = 's32[1]{0}', space=sflag, size = 0x4, scoped, tag = 'scoped memory for tile.8']
  %s0 = inlined_call_operand.vmem [shape: f32[8], index: 0, kind: input, shape index: {}]
  %s1 = inlined_call_operand.vmem [shape: f32[16,8], index: 1, kind: output, shape index: {}]
  // Predicated region
  $region2: #{tile.8} parent=0 // pred_check
    _
  $region3: #{tile.8} parent=0 // pred_check_branch
    %3 = sbr.rel (0) target = $region5
  $region4: #{tile.8} parent=0 // pred_region
    _
  $region5: #{tile.8} parent=0 // pred_fallthru
    _
  %v4 = vld [vmem:[%s0] ss:$0 sm:$0xff]
  %5 = vst [vmem:[%s1] sm:$0xff] %v4
  %s6 = scalar_lea.vmem %s1, 8
  %7 = vst [vmem:[%s6] sm:$0xff] %v4

// kernel: tile.9
$region0: #{tile.9}
  %s0 = inlined_call_operand.vmem [shape: f32[16,8], index: 0, kind: input, shape index: {}]
  %s1 = inlined_call_operand.vmem [shape: f32[1,128], index: 1, kind: output, shape index: {}]
  $region1: #{tile.9} parent=0
    #allocation0 [shape = 'u8[4096]{0}', space=vmem, size = 0x1000, scoped, tag = 'scoped mem for output reshape']
    %v2 = vld [vmem:[%s0] sm:$0x1]
    %vm3 = vcmask 64512
    %4 = vst.msk [vmem:[#allocation0] sm:$0x1] %vm3, %v2
    %s5 = scalar_lea.vmem %s0, 15
    %v6 = vld [vmem:[%s5] sm:$0x1]
    %7 = vrot.lane.b32.xlu0 %v6, 120
    %v8 = vpop.permute.xlu0 %7
    %vm9 = vcmask 1048512
    %10 = vst.msk [vmem:[#allocation0] sm:$0x1] %vm9, %v8
    %s11 = scalar_lea.vmem %s0, 14
    %v12 = vld [vmem:[%s11] sm:$0x1]
    %13 = vrot.lane.b32.xlu0 %v12, 112
    %v14 = vpop.permute.xlu0 %13
    %vm15 = vcmask 982912
    %16 = vst.msk [vmem:[#allocation0] sm:$0x1] %vm15, %v14
    %s17 = scalar_lea.vmem %s0, 13
    %v18 = vld [vmem:[%s17] sm:$0x1]
    %19 = vrot.lane.b32.xlu0 %v18, 104
    %v20 = vpop.permute.xlu0 %19
    %vm21 = vcmask 917312
    %22 = vst.msk [vmem:[#allocation0] sm:$0x1] %vm21, %v20
    %s23 = scalar_lea.vmem %s0, 12
    %v24 = vld [vmem:[%s23] sm:$0x1]
    %25 = vrot.lane.b32.xlu0 %v24, 96
    %v26 = vpop.permute.xlu0 %25
    %vm27 = vcmask 851712
    %28 = vst.msk [vmem:[#allocation0] sm:$0x1] %vm27, %v26
    %s29 = scalar_lea.vmem %s0, 11
    %v30 = vld [vmem:[%s29] sm:$0x1]
    %31 = vrot.lane.b32.xlu0 %v30, 88
    %v32 = vpop.permute.xlu0 %31
    %vm33 = vcmask 786112
    %34 = vst.msk [vmem:[#allocation0] sm:$0x1] %vm33, %v32
    %s35 = scalar_lea.vmem %s0, 10
    %v36 = vld [vmem:[%s35] sm:$0x1]
    %37 = vrot.lane.b32.xlu0 %v36, 80
    %v38 = vpop.permute.xlu0 %37
    %vm39 = vcmask 720512
    %40 = vst.msk [vmem:[#allocation0] sm:$0x1] %vm39, %v38
    %s41 = scalar_lea.vmem %s0, 9
    %v42 = vld [vmem:[%s41] sm:$0x1]
    %43 = vrot.lane.b32.xlu0 %v42, 72
    %v44 = vpop.permute.xlu0 %43
    %vm45 = vcmask 654912
    %46 = vst.msk [vmem:[#allocation0] sm:$0x1] %vm45, %v44
    %s47 = scalar_lea.vmem %s0, 8
    %v48 = vld [vmem:[%s47] sm:$0x1]
    %49 = vrot.lane.b32.xlu0 %v48, 64
    %v50 = vpop.permute.xlu0 %49
    %vm51 = vcmask 589312
    %52 = vst.msk [vmem:[#allocation0] sm:$0x1] %vm51, %v50
    %s53 = scalar_lea.vmem %s0, 7
    %v54 = vld [vmem:[%s53] sm:$0x1]
    %55 = vrot.lane.b32.xlu0 %v54, 56
    %v56 = vpop.permute.xlu0 %55
    %vm57 = vcmask 523712
    %58 = vst.msk [vmem:[#allocation0] sm:$0x1] %vm57, %v56
    %s59 = scalar_lea.vmem %s0, 6
    %v60 = vld [vmem:[%s59] sm:$0x1]
    %61 = vrot.lane.b32.xlu0 %v60, 48
    %v62 = vpop.permute.xlu0 %61
    %vm63 = vcmask 458112
    %64 = vst.msk [vmem:[#allocation0] sm:$0x1] %vm63, %v62
    %s65 = scalar_lea.vmem %s0, 5
    %v66 = vld [vmem:[%s65] sm:$0x1]
    %67 = vrot.lane.b32.xlu0 %v66, 40
    %v68 = vpop.permute.xlu0 %67
    %vm69 = vcmask 392512
    %70 = vst.msk [vmem:[#allocation0] sm:$0x1] %vm69, %v68
    %s71 = scalar_lea.vmem %s0, 4
    %v72 = vld [vmem:[%s71] sm:$0x1]
    %73 = vrot.lane.b32.xlu0 %v72, 32
    %v74 = vpop.permute.xlu0 %73
    %vm75 = vcmask 326912
    %76 = vst.msk [vmem:[#allocation0] sm:$0x1] %vm75, %v74
    %s77 = scalar_lea.vmem %s0, 3
    %v78 = vld [vmem:[%s77] sm:$0x1]
    %79 = vrot.lane.b32.xlu0 %v78, 24
    %v80 = vpop.permute.xlu0 %79
    %vm81 = vcmask 261312
    %82 = vst.msk [vmem:[#allocation0] sm:$0x1] %vm81, %v80
    %s83 = scalar_lea.vmem %s0, 2
    %v84 = vld [vmem:[%s83] sm:$0x1]
    %85 = vrot.lane.b32.xlu0 %v84, 16
    %v86 = vpop.permute.xlu0 %85
    %vm87 = vcmask 195712
    %88 = vst.msk [vmem:[#allocation0] sm:$0x1] %vm87, %v86
    %s89 = scalar_lea.vmem %s0, 1
    %v90 = vld [vmem:[%s89] sm:$0x1]
    %91 = vrot.lane.b32.xlu0 %v90, 8
    %v92 = vpop.permute.xlu0 %91
    %vm93 = vcmask 130112
    %94 = vst.msk [vmem:[#allocation0] sm:$0x1] %vm93, %v92
    %s96 = sshllo.u32 0, 1
    %v98 = vld [vmem:[#allocation0] sm:%s96]
    %s99 = sshllo.u32 0, 1
    %100 = vst [vmem:[%s1] sm:%s99] %v98

// kernel: elmo_forward.1
$region0: #{elmo_forward.1}
  #allocation0 [shape = 'u32[]', space=smem, size = 0x4, offset = 0x4, fixed_abs, tag = 'smem constant byte address 0x4 - core index']
  #allocation1 [shape = 'u32[144,128]{1,0:T(1,128)}', space=vmem, size = 0x12000, scoped, tag = 'internal scratch']
  %s0 = inlined_call_operand.vmem [shape: bf16[16,512], index: 0, kind: input, shape index: {}]
  %s1 = inlined_call_operand.vmem [shape: bf16[512,128], index: 1, kind: input, shape index: {}]
  %s2 = inlined_call_operand.vmem [shape: f32[1,128], index: 2, kind: input, shape index: {}]
  %s3 = inlined_call_operand.vmem [shape: f32[16,128], index: 3, kind: output, shape index: {}]
  %s4 = sld [smem:[#allocation0]]
  $region22: #{elmo_forward.1} parent=0
    _
  %s6 = ssub.s32 1, %s4
  %s7 = scalar_select 0, %s6, %s4
  // Predicated region
  $region2: #{elmo_forward.1} parent=0 // pred_check
    _
  $region3: #{elmo_forward.1} parent=0 // pred_check_branch
    %9 = sbr.rel (0) target = $region5
  $region4: #{elmo_forward.1} parent=0 // pred_region
    _
  $region5: #{elmo_forward.1} parent=0 // pred_fallthru
    _
  // Predicated region
  $region6: #{elmo_forward.1} parent=0 // pred_check
    _
  $region7: #{elmo_forward.1} parent=0 // pred_check_branch
    %11 = sbr.rel (0) target = $region9
  $region8: #{elmo_forward.1} parent=0 // pred_region
    _
  $region9: #{elmo_forward.1} parent=0 // pred_fallthru
    _
  // Predicated region
  $region10: #{elmo_forward.1} parent=0 // pred_check
    _
  $region11: #{elmo_forward.1} parent=0 // pred_check_branch
    %13 = sbr.rel (0) target = $region13
  $region12: #{elmo_forward.1} parent=0 // pred_region
    _
  $region13: #{elmo_forward.1} parent=0 // pred_fallthru
    _
  %v15 = vld [vmem:[%s0] sm:$0xff]
  %v16 = vld [vmem:[%s0 + $0x8] sm:$0xff]
  %v17 = vld [vmem:[%s0 + $0x10] sm:$0xff]
  %v18 = vld [vmem:[%s0 + $0x18] sm:$0xff]
  %v19 = vld [vmem:[%s1] sm:$0xf]
  %v20 = vld [vmem:[%s1 + $0x4] sm:$0xf]
  %v21 = vld [vmem:[%s1 + $0x8] sm:$0xf]
  %v22 = vld [vmem:[%s1 + $0xc] sm:$0xf]
  %v23 = vld [vmem:[%s1 + $0x10] sm:$0xf]
  %v24 = vld [vmem:[%s1 + $0x14] sm:$0xf]
  %v25 = vld [vmem:[%s1 + $0x18] sm:$0xf]
  %v26 = vld [vmem:[%s1 + $0x1c] sm:$0xf]
  %v27 = vld [vmem:[%s1 + $0x20] sm:$0xf]
  %v28 = vld [vmem:[%s1 + $0x24] sm:$0xf]
  %v29 = vld [vmem:[%s1 + $0x28] sm:$0xf]
  %v30 = vld [vmem:[%s1 + $0x2c] sm:$0xf]
  %v31 = vld [vmem:[%s1 + $0x30] sm:$0xf]
  %v32 = vld [vmem:[%s1 + $0x34] sm:$0xf]
  %v33 = vld [vmem:[%s1 + $0x38] sm:$0xf]
  %v34 = vld [vmem:[%s1 + $0x3c] sm:$0xf]
  %v35 = vld [vmem:[%s1 + $0x40] sm:$0xf]
  %v36 = vld [vmem:[%s1 + $0x44] sm:$0xf]
  %v37 = vld [vmem:[%s1 + $0x48] sm:$0xf]
  %v38 = vld [vmem:[%s1 + $0x4c] sm:$0xf]
  %v39 = vld [vmem:[%s1 + $0x50] sm:$0xf]
  %v40 = vld [vmem:[%s1 + $0x54] sm:$0xf]
  %v41 = vld [vmem:[%s1 + $0x58] sm:$0xf]
  %v42 = vld [vmem:[%s1 + $0x5c] sm:$0xf]
  %v43 = vld [vmem:[%s1 + $0x60] sm:$0xf]
  %v44 = vld [vmem:[%s1 + $0x64] sm:$0xf]
  %v45 = vld [vmem:[%s1 + $0x68] sm:$0xf]
  %v46 = vld [vmem:[%s1 + $0x6c] sm:$0xf]
  %v47 = vld [vmem:[%s1 + $0x70] sm:$0xf]
  %v48 = vld [vmem:[%s1 + $0x74] sm:$0xf]
  %v49 = vld [vmem:[%s1 + $0x78] sm:$0xf]
  %v50 = vld [vmem:[%s1 + $0x7c] sm:$0xf]
  %v51 = vld [vmem:[%s1 + $0x80] sm:$0xf]
  %v52 = vld [vmem:[%s1 + $0x84] sm:$0xf]
  %v53 = vld [vmem:[%s1 + $0x88] sm:$0xf]
  %v54 = vld [vmem:[%s1 + $0x8c] sm:$0xf]
  %v55 = vld [vmem:[%s1 + $0x90] sm:$0xf]
  %v56 = vld [vmem:[%s1 + $0x94] sm:$0xf]
  %v57 = vld [vmem:[%s1 + $0x98] sm:$0xf]
  %v58 = vld [vmem:[%s1 + $0x9c] sm:$0xf]
  %v59 = vld [vmem:[%s1 + $0xa0] sm:$0xf]
  %v60 = vld [vmem:[%s1 + $0xa4] sm:$0xf]
  %v61 = vld [vmem:[%s1 + $0xa8] sm:$0xf]
  %v62 = vld [vmem:[%s1 + $0xac] sm:$0xf]
  %v63 = vld [vmem:[%s1 + $0xb0] sm:$0xf]
  %v64 = vld [vmem:[%s1 + $0xb4] sm:$0xf]
  %v65 = vld [vmem:[%s1 + $0xb8] sm:$0xf]
  %v66 = vld [vmem:[%s1 + $0xbc] sm:$0xf]
  %v67 = vld [vmem:[%s1 + $0xc0] sm:$0xf]
  %v68 = vld [vmem:[%s1 + $0xc4] sm:$0xf]
  %v69 = vld [vmem:[%s1 + $0xc8] sm:$0xf]
  %v70 = vld [vmem:[%s1 + $0xcc] sm:$0xf]
  %v71 = vld [vmem:[%s1 + $0xd0] sm:$0xf]
  %v72 = vld [vmem:[%s1 + $0xd4] sm:$0xf]
  %v73 = vld [vmem:[%s1 + $0xd8] sm:$0xf]
  %v74 = vld [vmem:[%s1 + $0xdc] sm:$0xf]
  %v75 = vld [vmem:[%s1 + $0xe0] sm:$0xf]
  %v76 = vld [vmem:[%s1 + $0xe4] sm:$0xf]
  %v77 = vld [vmem:[%s1 + $0xe8] sm:$0xf]
  %v78 = vld [vmem:[%s1 + $0xec] sm:$0xf]
  %v79 = vld [vmem:[%s1 + $0xf0] sm:$0xf]
  %v80 = vld [vmem:[%s1 + $0xf4] sm:$0xf]
  %v81 = vld [vmem:[%s1 + $0xf8] sm:$0xf]
  %v82 = vld [vmem:[%s1 + $0xfc] sm:$0xf]
  %v83 = vld [vmem:[%s2] sm:$0x1]
  %v85 = vlaneseq
  %v86 = vshrl.u32 %v85, 7
  %v87 = vsub.s32 0, %v86
  %v88 = vrot.slane %v83, %v87
  %v94 = vunpack.c.l.b16 %v15
  %v95 = vunpack.c.h.b16 %v15
  %v96 = vunpack.c.l.b16 %v16
  %v97 = vunpack.c.h.b16 %v16
  %v98 = vunpack.c.l.b16 %v17
  %v99 = vunpack.c.h.b16 %v17
  %v100 = vunpack.c.l.b16 %v18
  %v101 = vunpack.c.h.b16 %v18
  %v102 = vpack.c.b16 %v98, %v94
  %v103 = vpack.c.b16 %v99, %v95
  %v104 = vpack.c.b16 %v100, %v96
  %v105 = vpack.c.b16 %v101, %v97
  %v174 = vunpack.c.l.b16 %v19
  %v175 = vunpack.c.l.b16 %v20
  %v176 = vunpack.c.l.b16 %v21
  %v177 = vunpack.c.l.b16 %v22
  %v178 = vunpack.c.l.b16 %v23
  %v179 = vunpack.c.l.b16 %v24
  %v180 = vunpack.c.l.b16 %v25
  %v181 = vunpack.c.l.b16 %v26
  %v182 = vunpack.c.l.b16 %v27
  %v183 = vunpack.c.l.b16 %v28
  %v184 = vunpack.c.l.b16 %v29
  %v185 = vunpack.c.l.b16 %v30
  %v186 = vunpack.c.l.b16 %v31
  %v187 = vunpack.c.l.b16 %v32
  %v188 = vunpack.c.l.b16 %v33
  %v189 = vunpack.c.l.b16 %v34
  %v190 = vunpack.c.l.b16 %v35
  %v191 = vunpack.c.l.b16 %v36
  %v192 = vunpack.c.l.b16 %v37
  %v193 = vunpack.c.l.b16 %v38
  %v194 = vunpack.c.l.b16 %v39
  %v195 = vunpack.c.l.b16 %v40
  %v196 = vunpack.c.l.b16 %v41
  %v197 = vunpack.c.l.b16 %v42
  %v198 = vunpack.c.l.b16 %v43
  %v199 = vunpack.c.l.b16 %v44
  %v200 = vunpack.c.l.b16 %v45
  %v201 = vunpack.c.l.b16 %v46
  %v202 = vunpack.c.l.b16 %v47
  %v203 = vunpack.c.l.b16 %v48
  %v204 = vunpack.c.l.b16 %v49
  %v205 = vunpack.c.l.b16 %v50
  %v206 = vunpack.c.l.b16 %v51
  %v207 = vunpack.c.l.b16 %v52
  %v208 = vunpack.c.l.b16 %v53
  %v209 = vunpack.c.l.b16 %v54
  %v210 = vunpack.c.l.b16 %v55
  %v211 = vunpack.c.l.b16 %v56
  %v212 = vunpack.c.l.b16 %v57
  %v213 = vunpack.c.l.b16 %v58
  %v214 = vunpack.c.l.b16 %v59
  %v215 = vunpack.c.l.b16 %v60
  %v216 = vunpack.c.l.b16 %v61
  %v217 = vunpack.c.l.b16 %v62
  %v218 = vunpack.c.l.b16 %v63
  %v219 = vunpack.c.l.b16 %v64
  %v220 = vunpack.c.l.b16 %v65
  %v221 = vunpack.c.l.b16 %v66
  %v222 = vunpack.c.l.b16 %v67
  %v223 = vunpack.c.l.b16 %v68
  %v224 = vunpack.c.l.b16 %v69
  %v225 = vunpack.c.l.b16 %v70
  %v226 = vunpack.c.l.b16 %v71
  %v227 = vunpack.c.l.b16 %v72
  %v228 = vunpack.c.l.b16 %v73
  %v229 = vunpack.c.l.b16 %v74
  %v230 = vunpack.c.l.b16 %v75
  %v231 = vunpack.c.l.b16 %v76
  %v232 = vunpack.c.l.b16 %v77
  %v233 = vunpack.c.l.b16 %v78
  %v234 = vunpack.c.l.b16 %v79
  %v235 = vunpack.c.l.b16 %v80
  %v236 = vunpack.c.l.b16 %v81
  %v237 = vunpack.c.l.b16 %v82
  %v238 = vpack.c.b16 %v175, %v174
  %v239 = vpack.c.b16 %v177, %v176
  %v240 = vpack.c.b16 %v179, %v178
  %v241 = vpack.c.b16 %v181, %v180
  %v242 = vpack.c.b16 %v183, %v182
  %v243 = vpack.c.b16 %v185, %v184
  %v244 = vpack.c.b16 %v187, %v186
  %v245 = vpack.c.b16 %v189, %v188
  %v246 = vpack.c.b16 %v191, %v190
  %v247 = vpack.c.b16 %v193, %v192
  %v248 = vpack.c.b16 %v195, %v194
  %v249 = vpack.c.b16 %v197, %v196
  %v250 = vpack.c.b16 %v199, %v198
  %v251 = vpack.c.b16 %v201, %v200
  %v252 = vpack.c.b16 %v203, %v202
  %v253 = vpack.c.b16 %v205, %v204
  %v254 = vpack.c.b16 %v207, %v206
  %v255 = vpack.c.b16 %v209, %v208
  %v256 = vpack.c.b16 %v211, %v210
  %v257 = vpack.c.b16 %v213, %v212
  %v258 = vpack.c.b16 %v215, %v214
  %v259 = vpack.c.b16 %v217, %v216
  %v260 = vpack.c.b16 %v219, %v218
  %v261 = vpack.c.b16 %v221, %v220
  %v262 = vpack.c.b16 %v223, %v222
  %v263 = vpack.c.b16 %v225, %v224
  %v264 = vpack.c.b16 %v227, %v226
  %v265 = vpack.c.b16 %v229, %v228
  %v266 = vpack.c.b16 %v231, %v230
  %v267 = vpack.c.b16 %v233, %v232
  %v268 = vpack.c.b16 %v235, %v234
  %v269 = vpack.c.b16 %v237, %v236
  %302 = vmatprep.subr.bf16.mxu0 0
  %303 = vmatpush1.bf16.msra.mxu0 %v238
  %304 = vmatprep.subr.bf16.mxu0 0
  %305 = vmatpush1.bf16.msra.mxu0 %v239
  %306 = vmatprep.subr.bf16.mxu0 0
  %307 = vmatpush1.bf16.msra.mxu0 %v240
  %308 = vmatprep.subr.bf16.mxu0 0
  %309 = vmatpush1.bf16.msra.mxu0 %v241
  %310 = vmatprep.subr.bf16.mxu0 0
  %311 = vmatpush1.bf16.msra.mxu0 %v242
  %312 = vmatprep.subr.bf16.mxu0 0
  %313 = vmatpush1.bf16.msra.mxu0 %v243
  %314 = vmatprep.subr.bf16.mxu0 0
  %315 = vmatpush1.bf16.msra.mxu0 %v244
  %316 = vmatprep.subr.bf16.mxu0 0
  %317 = vmatpush1.bf16.msra.mxu0 %v245
  %318 = vmatprep.subr.bf16.mxu0 0
  %319 = vmatpush1.bf16.msra.mxu0 %v246
  %320 = vmatprep.subr.bf16.mxu0 0
  %321 = vmatpush1.bf16.msra.mxu0 %v247
  %322 = vmatprep.subr.bf16.mxu0 0
  %323 = vmatpush1.bf16.msra.mxu0 %v248
  %324 = vmatprep.subr.bf16.mxu0 0
  %325 = vmatpush1.bf16.msra.mxu0 %v249
  %326 = vmatprep.subr.bf16.mxu0 0
  %327 = vmatpush1.bf16.msra.mxu0 %v250
  %328 = vmatprep.subr.bf16.mxu0 0
  %329 = vmatpush1.bf16.msra.mxu0 %v251
  %330 = vmatprep.subr.bf16.mxu0 0
  %331 = vmatpush1.bf16.msra.mxu0 %v252
  %332 = vmatprep.subr.bf16.mxu0 0
  %333 = vmatpush1.bf16.msra.mxu0 %v253
  %334 = vmatprep.mubr.bf16.mxu0 %v103
  %335 = vmatmul.mubr.bf16.gmra.mrb[0].mxu0 %v102
  %v336 = vpop.f32.mrb[0].mxu0
  %v337 = vadd.f32 %v88, %v336
  %v338 = vpop.f32.mrb[0].mxu0
  %v339 = vpop.f32.mrb[0].mxu0
  %v340 = vadd.f32 %v88, %v339
  %v341 = vpop.f32.mrb[0].mxu0
  %342 = vdwg.mxu0
  %343 = vmatprep.subr.bf16.mxu0 0
  %344 = vmatpush1.bf16.msra.mxu0 %v254
  %345 = vmatprep.subr.bf16.mxu0 0
  %346 = vmatpush1.bf16.msra.mxu0 %v255
  %347 = vmatprep.subr.bf16.mxu0 0
  %348 = vmatpush1.bf16.msra.mxu0 %v256
  %349 = vmatprep.subr.bf16.mxu0 0
  %350 = vmatpush1.bf16.msra.mxu0 %v257
  %351 = vmatprep.subr.bf16.mxu0 0
  %352 = vmatpush1.bf16.msra.mxu0 %v258
  %353 = vmatprep.subr.bf16.mxu0 0
  %354 = vmatpush1.bf16.msra.mxu0 %v259
  %355 = vmatprep.subr.bf16.mxu0 0
  %356 = vmatpush1.bf16.msra.mxu0 %v260
  %357 = vmatprep.subr.bf16.mxu0 0
  %358 = vmatpush1.bf16.msra.mxu0 %v261
  %359 = vmatprep.subr.bf16.mxu0 0
  %360 = vmatpush1.bf16.msra.mxu0 %v262
  %361 = vmatprep.subr.bf16.mxu0 0
  %362 = vmatpush1.bf16.msra.mxu0 %v263
  %363 = vmatprep.subr.bf16.mxu0 0
  %364 = vmatpush1.bf16.msra.mxu0 %v264
  %365 = vmatprep.subr.bf16.mxu0 0
  %366 = vmatpush1.bf16.msra.mxu0 %v265
  %367 = vmatprep.subr.bf16.mxu0 0
  %368 = vmatpush1.bf16.msra.mxu0 %v266
  %369 = vmatprep.subr.bf16.mxu0 0
  %370 = vmatpush1.bf16.msra.mxu0 %v267
  %371 = vmatprep.subr.bf16.mxu0 0
  %372 = vmatpush1.bf16.msra.mxu0 %v268
  %373 = vmatprep.subr.bf16.mxu0 0
  %374 = vmatpush1.bf16.msra.mxu0 %v269
  %375 = vmatprep.mubr.bf16.mxu0 %v105
  %376 = vmatmul.mubr.bf16.gmra.mrb[0].mxu0 %v104
  %v377 = vpop.f32.mrb[0].mxu0
  %v378 = vadd.f32 %v337, %v377
  %v379 = vpop.f32.mrb[0].mxu0
  %v380 = vpop.f32.mrb[0].mxu0
  %v381 = vadd.f32 %v340, %v380
  %v382 = vpop.f32.mrb[0].mxu0
  %383 = vdwg.mxu0
  %384 = vst [vmem:[%s3] sm:$0xff] %v378
  %385 = vst [vmem:[%s3 + $0x8] sm:$0xff] %v381
  // Predicated region
  $region14: #{elmo_forward.1} parent=0 // pred_check
    _
  $region15: #{elmo_forward.1} parent=0 // pred_check_branch
    %387 = sbr.rel (0) target = $region17
  $region16: #{elmo_forward.1} parent=0 // pred_region
    _
  $region17: #{elmo_forward.1} parent=0 // pred_fallthru
    _
  // Predicated region
  $region18: #{elmo_forward.1} parent=0 // pred_check
    _
  $region19: #{elmo_forward.1} parent=0 // pred_check_branch
    %389 = sbr.rel (0) target = $region21
  $region20: #{elmo_forward.1} parent=0 // pred_region
    _
  $region21: #{elmo_forward.1} parent=0 // pred_fallthru
    _

</llo_original>
